<compile_context>
chip_gen: v7x
topology: tpu7x:2x2x1
jax: 0.10.0
libtpu: 0.0.40
codegen_flags: <defaults>
</compile_context>

<pallas_src>
import functools
import math

import jax
import jax.numpy as jnp
from jax import lax
from jax.experimental import pallas as pl
from jax.experimental.pallas import tpu as pltpu


_SQRT_HALF = 1.0 / math.sqrt(2.0)


# ---------------------------------------------------------------------------- kernel helpers

def _layer_norm_f32(x_f32, gamma_f32, beta_f32, eps):
    mean = jnp.mean(x_f32, axis=-1, keepdims=True)
    xc = x_f32 - mean
    var = jnp.mean(xc * xc, axis=-1, keepdims=True)          # biased variance (torch default)
    return xc * lax.rsqrt(var + eps) * gamma_f32 + beta_f32


def _gelu(h_f32, *, approximate, elt_dtype):
    if approximate:
        # tanh-approx GELU evaluated in the (low-precision) matmul dtype: the transcendental
        # routes through the EUP (free slot under the MXU) and bf16 VPU on v6e/v7x halves
        # elementwise work / vreg pressure.  ~1e-3 deviation vs torch.nn.GELU() default.
        return jax.nn.gelu(h_f32.astype(elt_dtype), approximate=True)
    # exact erf GELU in f32 — bit-for-bit the torch.nn.GELU() default (parity path).
    return (0.5 * h_f32 * (1.0 + lax.erf(h_f32 * _SQRT_HALF))).astype(elt_dtype)


# ---------------------------------------------------------------------------- kernels

def _ffn_kernel_resident(x_ref, g_ref, beta_ref, w1_ref, b1_ref, w2_ref, b2_ref, o_ref,
                         *, eps, approximate_gelu):
    """n_h == 1 fast path: weights fully VMEM-resident, no scratch round-trip."""
    xn = _layer_norm_f32(x_ref[...].astype(jnp.float32),
                         g_ref[...].astype(jnp.float32),
                         beta_ref[...].astype(jnp.float32), eps)
    xn = xn.astype(w1_ref.dtype)
    h = jnp.dot(xn, w1_ref[...], preferred_element_type=jnp.float32)      # (tm, H) f32
    h = h + b1_ref[...].astype(jnp.float32)
    h = _gelu(h, approximate=approximate_gelu, elt_dtype=w2_ref.dtype)
    out = jnp.dot(h, w2_ref[...], preferred_element_type=jnp.float32)     # (tm, D) f32
    o_ref[...] = (out + b2_ref[...].astype(jnp.float32)).astype(o_ref.dtype)


def _ffn_kernel_tiled(x_ref, g_ref, beta_ref, w1_ref, b1_ref, w2_ref, b2_ref, o_ref,
                      xn_ref, acc_ref, *, eps, approximate_gelu):
    """Hidden-tiled path: grid=(row_tiles, hidden_tiles), accumulator over the hidden axis."""
    j = pl.program_id(1)

    # LayerNorm once per row tile; result cached in VMEM scratch in the matmul compute dtype.
    @pl.when(j == 0)
    def _():
        xn = _layer_norm_f32(x_ref[...].astype(jnp.float32),
                             g_ref[...].astype(jnp.float32),
                             beta_ref[...].astype(jnp.float32), eps)
        xn_ref[...] = xn.astype(xn_ref.dtype)
        acc_ref[...] = jnp.zeros_like(acc_ref)

    # Linear(dim -> hidden slab): (tm, D) @ (D, th) -> f32 (tm, th)
    h = jnp.dot(xn_ref[...], w1_ref[...], preferred_element_type=jnp.float32)
    h = h + b1_ref[...].astype(jnp.float32)
    h = _gelu(h, approximate=approximate_gelu, elt_dtype=w2_ref.dtype)

    # Linear(hidden slab -> dim), accumulated across hidden slabs in f32.
    acc_ref[...] += jnp.dot(h, w2_ref[...], preferred_element_type=jnp.float32)

    @pl.when(j == pl.num_programs(1) - 1)
    def _():
        o_ref[...] = (acc_ref[...] + b2_ref[...].astype(jnp.float32)).astype(o_ref.dtype)


# ---------------------------------------------------------------------------- wrapper helpers

def _round_up(x, m):
    return ((x + m - 1) // m) * m


def _cdiv(a, b):
    return -(-a // b)


def _vmem_budget_bytes():
    """Per-generation working-set budget (leaves headroom for Mosaic internal scratch)."""
    cap = None
    try:
        info = pltpu.get_tpu_info()
        cap = int(getattr(info, "vmem_capacity_bytes"))
    except Exception:
        cap = None
    if cap is None:
        cap = 128 * 1024 * 1024                      # v5e/v6e default
    if cap <= 64 * 1024 * 1024:                      # v7x: 64 MiB per TC
        return 48 * 1024 * 1024
    return min(100 * 1024 * 1024, int(0.8 * cap))    # v5e/v6e: use the 128 MiB


def _pick_tile_h(D, H, tm, cd_bytes, io_bytes, budget):
    """Keep weights fully resident whenever they fit; otherwise pick a D-aware hidden slab."""
    # bytes that don't depend on the hidden tiling
    fixed = 2 * tm * D * io_bytes      # x tile, double-buffered
    fixed += 2 * tm * D * io_bytes     # out tile, double-buffered
    fixed += 8 * (D + H) * 4           # gamma/beta/b1/b2 vectors (generous)

    # n_h == 1: W1 + W2 single-buffered + (tm, H) f32 + compute-dtype intermediates
    resident = 2 * D * H * cd_bytes + tm * H * (4 + cd_bytes)
    if fixed + resident <= budget:
        return H

    # Hidden-tiled: double-buffered (D, th)+(th, D) weight blocks, (tm, th) intermediates,
    # plus the (tm, D) LN scratch and f32 accumulator.
    fixed += tm * D * (cd_bytes + 4)
    per_th = 4 * D * cd_bytes + tm * (4 + cd_bytes)
    max_th = max(int((budget - fixed) // max(per_th, 1)), 128)

    best = None
    for cand in range(128, H + 1, 128):              # largest multiple-of-128 divisor <= max_th
        if H % cand == 0 and cand <= max_th:
            best = cand
    if best is None:
        for cand in range(128, H + 1, 128):          # smallest multiple-of-128 divisor
            if H % cand == 0:
                best = cand
                break
    if best is None:                                 # H < 128 or no usable divisor
        best = H
    return best


def _make_spec(block_shape, index_map, single_buffer):
    """Constant-block-index operands (resident weights/biases) only need ONE VMEM copy."""
    if single_buffer and hasattr(pl, "Buffered"):
        try:
            return pl.BlockSpec(block_shape, index_map, pipeline_mode=pl.Buffered(1))
        except TypeError:
            pass
    return pl.BlockSpec(block_shape, index_map)


# ---------------------------------------------------------------------------- public entry point

def feed_forward(x, gamma, beta, w1, b1, w2, b2, *, eps=1e-5, tile_m=512, tile_h=None,
                 compute_dtype=jnp.bfloat16, approximate_gelu=None):
    """x: (B, S, D). Weights use (in, out) layout: w1 (D, H), w2 (H, D). Dropout p=0.0 -> identity."""
    B, S, D = x.shape
    H = w1.shape[1]
    N = B * S
    cd = jnp.dtype(compute_dtype)

    # GELU mode: exact erf for the f32 parity path, tanh/EUP + bf16 elementwise for the perf path.
    if approximate_gelu is None:
        approximate_gelu = cd != jnp.dtype(jnp.float32)

    # Row tile: MXU-shaped (default 512, multiple of 8/128), never larger than needed.
    tm = min(_round_up(tile_m, 8), _round_up(N, 8))
    # v7x shards the 'parallel' row axis across 2 TensorCores: avoid a single row tile when
    # there is enough work to split in two.
    if N >= 2 * 128 and _round_up(N, tm) // tm == 1:
        tm = _round_up(_cdiv(N, 2), 8)
    n_pad = _round_up(N, tm)
    n_rows = n_pad // tm

    # Hidden tiling: VMEM-budget rule — keep weights fully resident whenever they fit.
    budget = _vmem_budget_bytes()
    if tile_h is None:
        tile_h = _pick_tile_h(D, H, tm, cd.itemsize, x.dtype.itemsize, budget)
    assert H % tile_h == 0 and (tile_h == H or tile_h % 128 == 0)
    th = tile_h
    n_h = H // th

    # Handle arbitrary row counts by zero-padding to a tile multiple (padded rows are discarded).
    x2 = x.reshape(N, D)
    if n_pad != N:
        x2 = jnp.pad(x2, ((0, n_pad - N), (0, 0)))

    # Weights cast once outside the kernel: halves their DMA traffic and feeds the MXU at bf16 rate.
    w1c = w1.astype(cd)
    w2c = w2.astype(cd)
    gamma2 = gamma.reshape(1, D).astype(jnp.float32)
    beta2 = beta.reshape(1, D).astype(jnp.float32)
    b1_2 = b1.reshape(1, H).astype(jnp.float32)
    b2_2 = b2.reshape(1, D).astype(jnp.float32)

    # VMEM limit sized to the actual blocks (with headroom), capped below the per-generation budget.
    wbuf = 1 if n_h == 1 else 2
    vmem_est = (
        4 * tm * D * x.dtype.itemsize                    # x + out tiles, double-buffered
        + wbuf * (D * th + th * D) * cd.itemsize         # W1 + W2 blocks
        + (0 if n_h == 1 else tm * D * (cd.itemsize + 4))  # LN scratch + f32 accumulator
        + tm * th * (4 + cd.itemsize)                    # (tm, th) intermediates
        + 8 * (D + H) * 4                                # small vectors
    )
    vmem_limit = int(min(max(int(1.5 * vmem_est), 16 * 1024 * 1024), budget))

    cost = pl.CostEstimate(
        flops=int(4.0 * n_pad * D * H + 10.0 * n_pad * (D + H)),
        transcendentals=int(n_pad * (H + D)),
        bytes_accessed=int(2 * n_pad * D * x.dtype.itemsize
                           + (w1c.size + w2c.size) * cd.itemsize
                           + (gamma2.size + beta2.size + b1_2.size + b2_2.size) * 4),
    )

    def _build_and_call(use_single_buffer):
        x_spec = pl.BlockSpec((tm, D), (lambda i: (i, 0)) if n_h == 1 else (lambda i, j: (i, 0)))
        out_spec = pl.BlockSpec((tm, D), (lambda i: (i, 0)) if n_h == 1 else (lambda i, j: (i, 0)))

        if n_h == 1:
            const = lambda i: (0, 0)
            g_spec = _make_spec((1, D), const, use_single_buffer)
            bt_spec = _make_spec((1, D), const, use_single_buffer)
            b2_spec = _make_spec((1, D), const, use_single_buffer)
            w1_spec = _make_spec((D, H), const, use_single_buffer)
            b1_spec = _make_spec((1, H), const, use_single_buffer)
            w2_spec = _make_spec((H, D), const, use_single_buffer)
            kernel = functools.partial(_ffn_kernel_resident, eps=eps,
                                       approximate_gelu=approximate_gelu)
            grid = (n_rows,)
            scratch = []
            dims = ("parallel",)
        else:
            const2 = lambda i, j: (0, 0)
            g_spec = _make_spec((1, D), const2, use_single_buffer)
            bt_spec = _make_spec((1, D), const2, use_single_buffer)
            b2_spec = _make_spec((1, D), const2, use_single_buffer)
            # hidden-tiled weights keep default double-buffering so their DMA pipelines over j
            w1_spec = pl.BlockSpec((D, th), lambda i, j: (0, j))
            b1_spec = pl.BlockSpec((1, th), lambda i, j: (0, j))
            w2_spec = pl.BlockSpec((th, D), lambda i, j: (j, 0))
            kernel = functools.partial(_ffn_kernel_tiled, eps=eps,
                                       approximate_gelu=approximate_gelu)
            grid = (n_rows, n_h)
            scratch = [
                pltpu.VMEM((tm, D), cd),                 # cached LayerNorm output
                pltpu.VMEM((tm, D), jnp.float32),        # output accumulator
            ]
            dims = ("parallel", "arbitrary")

        return pl.pallas_call(
            kernel,
            out_shape=jax.ShapeDtypeStruct((n_pad, D), x.dtype),
            grid_spec=pltpu.PrefetchScalarGridSpec(
                num_scalar_prefetch=0,
                grid=grid,
                in_specs=[x_spec, g_spec, bt_spec, w1_spec, b1_spec, w2_spec, b2_spec],
                out_specs=out_spec,
                scratch_shapes=scratch,
            ),
            compiler_params=pltpu.CompilerParams(
                dimension_semantics=dims,
                vmem_limit_bytes=vmem_limit,
            ),
            cost_estimate=cost,
        )(x2, gamma2, beta2, w1c, b1_2, w2c, b2_2)

    # Prefer single-buffered constant-index operands (saves ~half the weight VMEM); fall back
    # to default double-buffering if the installed Pallas rejects pipeline_mode=Buffered(1).
    try:
        out2 = _build_and_call(True)
    except Exception:
        out2 = _build_and_call(False)

    if n_pad != N:
        out2 = out2[:N]
    return out2.reshape(B, S, D)


# ---------------------------------------------------------------------------- reference & test

def _reference(x, gamma, beta, w1, b1, w2, b2, eps=1e-5):
    mean = jnp.mean(x, axis=-1, keepdims=True)
    var = jnp.mean((x - mean) ** 2, axis=-1, keepdims=True)
    xn = (x - mean) / jnp.sqrt(var + eps) * gamma + beta
    h = xn @ w1 + b1
    h = 0.5 * h * (1.0 + lax.erf(h / jnp.sqrt(2.0)))
    return h @ w2 + b2


def _init_params(key, D, H):
    kw1, kb1, kw2, kb2, kg, kb = jax.random.split(key, 6)
    lim1 = 1.0 / math.sqrt(D)
    lim2 = 1.0 / math.sqrt(H)
    gamma = 1.0 + 0.1 * jax.random.normal(kg, (D,), dtype=jnp.float32)
    beta = 0.1 * jax.random.normal(kb, (D,), dtype=jnp.float32)
    w1 = jax.random.uniform(kw1, (D, H), minval=-lim1, maxval=lim1, dtype=jnp.float32)
    b1 = jax.random.uniform(kb1, (H,), minval=-lim1, maxval=lim1, dtype=jnp.float32)
    w2 = jax.random.uniform(kw2, (H, D), minval=-lim2, maxval=lim2, dtype=jnp.float32)
    b2 = jax.random.uniform(kb2, (D,), minval=-lim2, maxval=lim2, dtype=jnp.float32)
    return gamma, beta, w1, b1, w2, b2


if __name__ == "__main__":
    key = jax.random.PRNGKey(0)
    k1, k2, k3, k4 = jax.random.split(key, 4)

    # --- Case 1: small ViT-like shapes, weight-resident fast path --------------------------
    B, S, D, Hdim = 2, 8, 32, 64
    x = jax.random.normal(k1, (B, S, D), dtype=jnp.float32)
    gamma, beta, w1, b1, w2, b2 = _init_params(k2, D, Hdim)
    ref = _reference(x, gamma, beta, w1, b1, w2, b2)

    # parity path: f32 MXU operands + exact erf GELU — must match torch semantics tightly
    out_f32 = jax.block_until_ready(
        feed_forward(x, gamma, beta, w1, b1, w2, b2, compute_dtype=jnp.float32))
    assert out_f32.shape == (B, S, D)
    assert jnp.allclose(out_f32, ref, atol=1e-4, rtol=1e-4), "f32 path mismatch vs reference"

    # performance path: bf16 MXU operands, f32 accumulation, tanh GELU in bf16 (EUP/VPU)
    out_bf16 = jax.block_until_ready(
        feed_forward(x, gamma, beta, w1, b1, w2, b2, compute_dtype=jnp.bfloat16))
    assert out_bf16.shape == (B, S, D)
    assert jnp.allclose(out_bf16, ref, atol=3e-2, rtol=3e-2), "bf16 path mismatch vs reference"

    # --- Case 2: ragged row count + forced hidden-dim tiling (accumulator path) ------------
    B2, S2, D2, H2 = 2, 13, 32, 256          # N = 26 rows (not a tile multiple), 2 hidden slabs
    x2 = jax.random.normal(k3, (B2, S2, D2), dtype=jnp.float32)
    params2 = _init_params(k4, D2, H2)
    ref2 = _reference(x2, *params2)
    out2 = jax.block_until_ready(
        feed_forward(x2, *params2, tile_h=128, compute_dtype=jnp.bfloat16))
    assert out2.shape == (B2, S2, D2)
    assert jnp.allclose(out2, ref2, atol=3e-2, rtol=3e-2), "hidden-tiled path mismatch vs reference"

    # TODO(synk): Dropout with p > 0 (training-mode RNG masking) is not implemented; the module's
    # default p=0.0 forward is the identity, which is what this kernel computes.
    print("KERNEL_OK")
</pallas_src>

<mosaic_0001>
module attributes {stable_mosaic.version = 11 : i64} {
  func.func @_ffn_kernel_resident(%arg0: i32, %arg1: memref<16x32xf32, #tpu.memory_space<vmem>>, %arg2: memref<1x32xf32, #tpu.memory_space<vmem>>, %arg3: memref<1x32xf32, #tpu.memory_space<vmem>>, %arg4: memref<32x64xf32, #tpu.memory_space<vmem>>, %arg5: memref<1x64xf32, #tpu.memory_space<vmem>>, %arg6: memref<64x32xf32, #tpu.memory_space<vmem>>, %arg7: memref<1x32xf32, #tpu.memory_space<vmem>>, %arg8: memref<16x32xf32, #tpu.memory_space<vmem>>) attributes {dimension_semantics = [#tpu.dimension_semantics<parallel>], iteration_bounds = array<i64: 1>, scalar_prefetch = 0 : i64, scratch_operands = 0 : i64, tpu.core_type = #tpu.core_type<tc>, window_params = [{transform_indices = @transform_0, window_bounds = array<i64: 16, 32>}, {pipeline_mode = #tpu.pipeline_mode<synchronous>, transform_indices = @transform_1, window_bounds = array<i64: 1, 32>}, {pipeline_mode = #tpu.pipeline_mode<synchronous>, transform_indices = @transform_2, window_bounds = array<i64: 1, 32>}, {pipeline_mode = #tpu.pipeline_mode<synchronous>, transform_indices = @transform_3, window_bounds = array<i64: 32, 64>}, {pipeline_mode = #tpu.pipeline_mode<synchronous>, transform_indices = @transform_4, window_bounds = array<i64: 1, 64>}, {pipeline_mode = #tpu.pipeline_mode<synchronous>, transform_indices = @transform_5, window_bounds = array<i64: 64, 32>}, {pipeline_mode = #tpu.pipeline_mode<synchronous>, transform_indices = @transform_6, window_bounds = array<i64: 1, 32>}, {transform_indices = @transform_7, window_bounds = array<i64: 16, 32>}]} {
    %c0 = arith.constant 0 : index
    %c0_0 = arith.constant 0 : index
    %0 = vector.load %arg1[%c0, %c0_0] : memref<16x32xf32, #tpu.memory_space<vmem>>, vector<16x32xf32>
    %c0_1 = arith.constant 0 : index
    %c0_2 = arith.constant 0 : index
    %1 = vector.load %arg2[%c0_1, %c0_2] : memref<1x32xf32, #tpu.memory_space<vmem>>, vector<1x32xf32>
    %c0_3 = arith.constant 0 : index
    %c0_4 = arith.constant 0 : index
    %2 = vector.load %arg3[%c0_3, %c0_4] : memref<1x32xf32, #tpu.memory_space<vmem>>, vector<1x32xf32>
    %cst = arith.constant dense<0.000000e+00> : vector<16xf32>
    %3 = vector.multi_reduction <add>, %0, %cst [1] : vector<16x32xf32> to vector<16xf32>
    %4 = vector.shape_cast %3 : vector<16xf32> to vector<16x1xf32>
    %cst_5 = arith.constant 3.200000e+01 : f32
    %5 = vector.broadcast %cst_5 : f32 to vector<16x1xf32>
    %6 = arith.divf %4, %5 : vector<16x1xf32>
    %7 = vector.broadcast %6 : vector<16x1xf32> to vector<16x32xf32>
    %8 = arith.subf %0, %7 : vector<16x32xf32>
    %9 = arith.mulf %8, %8 : vector<16x32xf32>
    %cst_6 = arith.constant dense<0.000000e+00> : vector<16xf32>
    %10 = vector.multi_reduction <add>, %9, %cst_6 [1] : vector<16x32xf32> to vector<16xf32>
    %11 = vector.shape_cast %10 : vector<16xf32> to vector<16x1xf32>
    %cst_7 = arith.constant 3.200000e+01 : f32
    %12 = vector.broadcast %cst_7 : f32 to vector<16x1xf32>
    %13 = arith.divf %11, %12 : vector<16x1xf32>
    %cst_8 = arith.constant 9.99999974E-6 : f32
    %14 = vector.broadcast %cst_8 : f32 to vector<16x1xf32>
    %15 = arith.addf %13, %14 : vector<16x1xf32>
    %16 = math.rsqrt %15 : vector<16x1xf32>
    %17 = vector.broadcast %16 : vector<16x1xf32> to vector<16x32xf32>
    %18 = arith.mulf %8, %17 : vector<16x32xf32>
    %19 = vector.broadcast %1 : vector<1x32xf32> to vector<16x32xf32>
    %20 = arith.mulf %18, %19 : vector<16x32xf32>
    %21 = vector.broadcast %2 : vector<1x32xf32> to vector<16x32xf32>
    %22 = arith.addf %20, %21 : vector<16x32xf32>
    %c0_9 = arith.constant 0 : index
    %c0_10 = arith.constant 0 : index
    %23 = vector.load %arg4[%c0_9, %c0_10] : memref<32x64xf32, #tpu.memory_space<vmem>>, vector<32x64xf32>
    %cst_11 = arith.constant dense<0.000000e+00> : vector<16x64xf32>
    %24 = tpu.matmul %22, %23, %cst_11 {dimension_numbers = #tpu.dot_dimension_numbers<[1], [0], [0], [1], [0, 0, 1, 1], [], []>} : vector<16x32xf32>, vector<32x64xf32>, vector<16x64xf32> -> vector<16x64xf32>
    %c0_12 = arith.constant 0 : index
    %c0_13 = arith.constant 0 : index
    %25 = vector.load %arg5[%c0_12, %c0_13] : memref<1x64xf32, #tpu.memory_space<vmem>>, vector<1x64xf32>
    %26 = vector.broadcast %25 : vector<1x64xf32> to vector<16x64xf32>
    %27 = arith.addf %24, %26 : vector<16x64xf32>
    %cst_14 = arith.constant 5.000000e-01 : f32
    %28 = vector.broadcast %cst_14 : f32 to vector<16x64xf32>
    %29 = arith.mulf %28, %27 : vector<16x64xf32>
    %cst_15 = arith.constant 0.707106769 : f32
    %30 = vector.broadcast %cst_15 : f32 to vector<16x64xf32>
    %31 = arith.mulf %27, %30 : vector<16x64xf32>
    %32 = math.erf %31 : vector<16x64xf32>
    %cst_16 = arith.constant 1.000000e+00 : f32
    %33 = vector.broadcast %cst_16 : f32 to vector<16x64xf32>
    %34 = arith.addf %33, %32 : vector<16x64xf32>
    %35 = arith.mulf %29, %34 : vector<16x64xf32>
    %c0_17 = arith.constant 0 : index
    %c0_18 = arith.constant 0 : index
    %36 = vector.load %arg6[%c0_17, %c0_18] : memref<64x32xf32, #tpu.memory_space<vmem>>, vector<64x32xf32>
    %cst_19 = arith.constant dense<0.000000e+00> : vector<16x32xf32>
    %37 = tpu.matmul %35, %36, %cst_19 {dimension_numbers = #tpu.dot_dimension_numbers<[1], [0], [0], [1], [0, 0, 1, 1], [], []>} : vector<16x64xf32>, vector<64x32xf32>, vector<16x32xf32> -> vector<16x32xf32>
    %c0_20 = arith.constant 0 : index
    %c0_21 = arith.constant 0 : index
    %38 = vector.load %arg7[%c0_20, %c0_21] : memref<1x32xf32, #tpu.memory_space<vmem>>, vector<1x32xf32>
    %39 = vector.broadcast %38 : vector<1x32xf32> to vector<16x32xf32>
    %40 = arith.addf %37, %39 : vector<16x32xf32>
    %c0_22 = arith.constant 0 : index
    %c0_23 = arith.constant 0 : index
    %41 = vector.load %arg8[%c0_22, %c0_23] : memref<16x32xf32, #tpu.memory_space<vmem>>, vector<16x32xf32>
    tpu.vector_store %arg8[%c0_22, %c0_23], %40 {strides = array<i32>} : memref<16x32xf32, #tpu.memory_space<vmem>>, vector<16x32xf32>,
    return
  }
  func.func @transform_0(%arg0: i32) -> (i32, i32) {
    %c0_i32 = arith.constant 0 : i32
    %c0_i32_0 = arith.constant 0 : i32
    return %arg0, %c0_i32 : i32, i32
  }
  func.func @transform_1(%arg0: i32) -> (i32, i32) {
    %c0_i32 = arith.constant 0 : i32
    %c0_i32_0 = arith.constant 0 : i32
    %c0_i32_1 = arith.constant 0 : i32
    return %c0_i32, %c0_i32_0 : i32, i32
  }
  func.func @transform_2(%arg0: i32) -> (i32, i32) {
    %c0_i32 = arith.constant 0 : i32
    %c0_i32_0 = arith.constant 0 : i32
    %c0_i32_1 = arith.constant 0 : i32
    return %c0_i32, %c0_i32_0 : i32, i32
  }
  func.func @transform_3(%arg0: i32) -> (i32, i32) {
    %c0_i32 = arith.constant 0 : i32
    %c0_i32_0 = arith.constant 0 : i32
    %c0_i32_1 = arith.constant 0 : i32
    return %c0_i32, %c0_i32_0 : i32, i32
  }
  func.func @transform_4(%arg0: i32) -> (i32, i32) {
    %c0_i32 = arith.constant 0 : i32
    %c0_i32_0 = arith.constant 0 : i32
    %c0_i32_1 = arith.constant 0 : i32
    return %c0_i32, %c0_i32_0 : i32, i32
  }
  func.func @transform_5(%arg0: i32) -> (i32, i32) {
    %c0_i32 = arith.constant 0 : i32
    %c0_i32_0 = arith.constant 0 : i32
    %c0_i32_1 = arith.constant 0 : i32
    return %c0_i32, %c0_i32_0 : i32, i32
  }
  func.func @transform_6(%arg0: i32) -> (i32, i32) {
    %c0_i32 = arith.constant 0 : i32
    %c0_i32_0 = arith.constant 0 : i32
    %c0_i32_1 = arith.constant 0 : i32
    return %c0_i32, %c0_i32_0 : i32, i32
  }
  func.func @transform_7(%arg0: i32) -> (i32, i32) {
    %c0_i32 = arith.constant 0 : i32
    %c0_i32_0 = arith.constant 0 : i32
    return %arg0, %c0_i32 : i32, i32
  }
}

module attributes {stable_mosaic.version = 11 : i64} {
  func.func @_ffn_kernel_resident(%arg0: i32, %arg1: memref<16x32xf32, #tpu.memory_space<vmem>>, %arg2: memref<1x32xf32, #tpu.memory_space<vmem>>, %arg3: memref<1x32xf32, #tpu.memory_space<vmem>>, %arg4: memref<32x64xf32, #tpu.memory_space<vmem>>, %arg5: memref<1x64xf32, #tpu.memory_space<vmem>>, %arg6: memref<64x32xf32, #tpu.memory_space<vmem>>, %arg7: memref<1x32xf32, #tpu.memory_space<vmem>>, %arg8: memref<16x32xf32, #tpu.memory_space<vmem>>) attributes {dimension_semantics = [#tpu.dimension_semantics<parallel>], iteration_bounds = array<i64: 1>, scalar_prefetch = 0 : i64, scratch_operands = 0 : i64, tpu.core_type = #tpu.core_type<tc>, window_params = [{transform_indices = @transform_0, window_bounds = array<i64: 16, 32>}, {pipeline_mode = #tpu.pipeline_mode<synchronous>, transform_indices = @transform_1, window_bounds = array<i64: 1, 32>}, {pipeline_mode = #tpu.pipeline_mode<synchronous>, transform_indices = @transform_2, window_bounds = array<i64: 1, 32>}, {pipeline_mode = #tpu.pipeline_mode<synchronous>, transform_indices = @transform_3, window_bounds = array<i64: 32, 64>}, {pipeline_mode = #tpu.pipeline_mode<synchronous>, transform_indices = @transform_4, window_bounds = array<i64: 1, 64>}, {pipeline_mode = #tpu.pipeline_mode<synchronous>, transform_indices = @transform_5, window_bounds = array<i64: 64, 32>}, {pipeline_mode = #tpu.pipeline_mode<synchronous>, transform_indices = @transform_6, window_bounds = array<i64: 1, 32>}, {transform_indices = @transform_7, window_bounds = array<i64: 16, 32>}]} {
    %c0 = arith.constant 0 : index
    %c0_0 = arith.constant 0 : index
    %0 = vector.load %arg1[%c0, %c0_0] : memref<16x32xf32, #tpu.memory_space<vmem>>, vector<16x32xf32>
    %c0_1 = arith.constant 0 : index
    %c0_2 = arith.constant 0 : index
    %1 = vector.load %arg2[%c0_1, %c0_2] : memref<1x32xf32, #tpu.memory_space<vmem>>, vector<1x32xf32>
    %c0_3 = arith.constant 0 : index
    %c0_4 = arith.constant 0 : index
    %2 = vector.load %arg3[%c0_3, %c0_4] : memref<1x32xf32, #tpu.memory_space<vmem>>, vector<1x32xf32>
    %cst = arith.constant dense<0.000000e+00> : vector<16xf32>
    %3 = vector.multi_reduction <add>, %0, %cst [1] : vector<16x32xf32> to vector<16xf32>
    %4 = vector.shape_cast %3 : vector<16xf32> to vector<16x1xf32>
    %cst_5 = arith.constant 3.200000e+01 : f32
    %5 = vector.broadcast %cst_5 : f32 to vector<16x1xf32>
    %6 = arith.divf %4, %5 : vector<16x1xf32>
    %7 = vector.broadcast %6 : vector<16x1xf32> to vector<16x32xf32>
    %8 = arith.subf %0, %7 : vector<16x32xf32>
    %9 = arith.mulf %8, %8 : vector<16x32xf32>
    %cst_6 = arith.constant dense<0.000000e+00> : vector<16xf32>
    %10 = vector.multi_reduction <add>, %9, %cst_6 [1] : vector<16x32xf32> to vector<16xf32>
    %11 = vector.shape_cast %10 : vector<16xf32> to vector<16x1xf32>
    %cst_7 = arith.constant 3.200000e+01 : f32
    %12 = vector.broadcast %cst_7 : f32 to vector<16x1xf32>
    %13 = arith.divf %11, %12 : vector<16x1xf32>
    %cst_8 = arith.constant 9.99999974E-6 : f32
    %14 = vector.broadcast %cst_8 : f32 to vector<16x1xf32>
    %15 = arith.addf %13, %14 : vector<16x1xf32>
    %16 = math.rsqrt %15 : vector<16x1xf32>
    %17 = vector.broadcast %16 : vector<16x1xf32> to vector<16x32xf32>
    %18 = arith.mulf %8, %17 : vector<16x32xf32>
    %19 = vector.broadcast %1 : vector<1x32xf32> to vector<16x32xf32>
    %20 = arith.mulf %18, %19 : vector<16x32xf32>
    %21 = vector.broadcast %2 : vector<1x32xf32> to vector<16x32xf32>
    %22 = arith.addf %20, %21 : vector<16x32xf32>
    %c0_9 = arith.constant 0 : index
    %c0_10 = arith.constant 0 : index
    %23 = vector.load %arg4[%c0_9, %c0_10] : memref<32x64xf32, #tpu.memory_space<vmem>>, vector<32x64xf32>
    %cst_11 = arith.constant dense<0.000000e+00> : vector<16x64xf32>
    %24 = tpu.matmul %22, %23, %cst_11 {dimension_numbers = #tpu.dot_dimension_numbers<[1], [0], [0], [1], [0, 0, 1, 1], [], []>} : vector<16x32xf32>, vector<32x64xf32>, vector<16x64xf32> -> vector<16x64xf32>
    %c0_12 = arith.constant 0 : index
    %c0_13 = arith.constant 0 : index
    %25 = vector.load %arg5[%c0_12, %c0_13] : memref<1x64xf32, #tpu.memory_space<vmem>>, vector<1x64xf32>
    %26 = vector.broadcast %25 : vector<1x64xf32> to vector<16x64xf32>
    %27 = arith.addf %24, %26 : vector<16x64xf32>
    %cst_14 = arith.constant 5.000000e-01 : f32
    %28 = vector.broadcast %cst_14 : f32 to vector<16x64xf32>
    %29 = arith.mulf %28, %27 : vector<16x64xf32>
    %cst_15 = arith.constant 0.707106769 : f32
    %30 = vector.broadcast %cst_15 : f32 to vector<16x64xf32>
    %31 = arith.mulf %27, %30 : vector<16x64xf32>
    %32 = math.erf %31 : vector<16x64xf32>
    %cst_16 = arith.constant 1.000000e+00 : f32
    %33 = vector.broadcast %cst_16 : f32 to vector<16x64xf32>
    %34 = arith.addf %33, %32 : vector<16x64xf32>
    %35 = arith.mulf %29, %34 : vector<16x64xf32>
    %c0_17 = arith.constant 0 : index
    %c0_18 = arith.constant 0 : index
    %36 = vector.load %arg6[%c0_17, %c0_18] : memref<64x32xf32, #tpu.memory_space<vmem>>, vector<64x32xf32>
    %cst_19 = arith.constant dense<0.000000e+00> : vector<16x32xf32>
    %37 = tpu.matmul %35, %36, %cst_19 {dimension_numbers = #tpu.dot_dimension_numbers<[1], [0], [0], [1], [0, 0, 1, 1], [], []>} : vector<16x64xf32>, vector<64x32xf32>, vector<16x32xf32> -> vector<16x32xf32>
    %c0_20 = arith.constant 0 : index
    %c0_21 = arith.constant 0 : index
    %38 = vector.load %arg7[%c0_20, %c0_21] : memref<1x32xf32, #tpu.memory_space<vmem>>, vector<1x32xf32>
    %39 = vector.broadcast %38 : vector<1x32xf32> to vector<16x32xf32>
    %40 = arith.addf %37, %39 : vector<16x32xf32>
    %c0_22 = arith.constant 0 : index
    %c0_23 = arith.constant 0 : index
    %41 = vector.load %arg8[%c0_22, %c0_23] : memref<16x32xf32, #tpu.memory_space<vmem>>, vector<16x32xf32>
    tpu.vector_store %arg8[%c0_22, %c0_23], %40 {strides = array<i32>} : memref<16x32xf32, #tpu.memory_space<vmem>>, vector<16x32xf32>,
    return
  }
  func.func @transform_0(%arg0: i32) -> (i32, i32) {
    %c0_i32 = arith.constant 0 : i32
    %c0_i32_0 = arith.constant 0 : i32
    return %arg0, %c0_i32 : i32, i32
  }
  func.func @transform_1(%arg0: i32) -> (i32, i32) {
    %c0_i32 = arith.constant 0 : i32
    %c0_i32_0 = arith.constant 0 : i32
    %c0_i32_1 = arith.constant 0 : i32
    return %c0_i32, %c0_i32_0 : i32, i32
  }
  func.func @transform_2(%arg0: i32) -> (i32, i32) {
    %c0_i32 = arith.constant 0 : i32
    %c0_i32_0 = arith.constant 0 : i32
    %c0_i32_1 = arith.constant 0 : i32
    return %c0_i32, %c0_i32_0 : i32, i32
  }
  func.func @transform_3(%arg0: i32) -> (i32, i32) {
    %c0_i32 = arith.constant 0 : i32
    %c0_i32_0 = arith.constant 0 : i32
    %c0_i32_1 = arith.constant 0 : i32
    return %c0_i32, %c0_i32_0 : i32, i32
  }
  func.func @transform_4(%arg0: i32) -> (i32, i32) {
    %c0_i32 = arith.constant 0 : i32
    %c0_i32_0 = arith.constant 0 : i32
    %c0_i32_1 = arith.constant 0 : i32
    return %c0_i32, %c0_i32_0 : i32, i32
  }
  func.func @transform_5(%arg0: i32) -> (i32, i32) {
    %c0_i32 = arith.constant 0 : i32
    %c0_i32_0 = arith.constant 0 : i32
    %c0_i32_1 = arith.constant 0 : i32
    return %c0_i32, %c0_i32_0 : i32, i32
  }
  func.func @transform_6(%arg0: i32) -> (i32, i32) {
    %c0_i32 = arith.constant 0 : i32
    %c0_i32_0 = arith.constant 0 : i32
    %c0_i32_1 = arith.constant 0 : i32
    return %c0_i32, %c0_i32_0 : i32, i32
  }
  func.func @transform_7(%arg0: i32) -> (i32, i32) {
    %c0_i32 = arith.constant 0 : i32
    %c0_i32_0 = arith.constant 0 : i32
    return %arg0, %c0_i32 : i32, i32
  }
}

</mosaic_0001>

<llo_original>
// kernel: tpu_custom_call.1
$region0: #{tpu_custom_call.1}
  #allocation0 [shape = 'u32[]', space=smem, size = 0x4, offset = 0x4, fixed_abs, tag = 'smem constant byte address 0x4 - core index']
  #allocation1 [shape = 'u32[144,128]{1,0:T(1,128)}', space=vmem, size = 0x12000, scoped, tag = 'internal scratch']
  %s0 = inlined_call_operand.vmem [shape: f32[16,32], index: 0, kind: input, shape index: {}]
  %s1 = inlined_call_operand.vmem [shape: f32[1,32], index: 1, kind: input, shape index: {}]
  %s2 = inlined_call_operand.vmem [shape: f32[1,32], index: 2, kind: input, shape index: {}]
  %s3 = inlined_call_operand.vmem [shape: f32[32,64], index: 3, kind: input, shape index: {}]
  %s4 = inlined_call_operand.vmem [shape: f32[1,64], index: 4, kind: input, shape index: {}]
  %s5 = inlined_call_operand.vmem [shape: f32[64,32], index: 5, kind: input, shape index: {}]
  %s6 = inlined_call_operand.vmem [shape: f32[1,32], index: 6, kind: input, shape index: {}]
  %s7 = inlined_call_operand.hbm [shape: f32[16,32], index: 7, kind: output, shape index: {}]
  %s8 = sld [smem:[#allocation0]]
  $region38: #{tpu_custom_call.1} parent=0
    _
  %s10 = ssub.s32 1, %s8
  %s11 = scalar_select 0, %s10, %s8
  $region1: #{tpu_custom_call.1} parent=0
    #allocation2 [shape = 'u8[8192]{0}', space=vmem, size = 0x2000, scoped, tag = 'output window, operand 0, single buffered']
    #allocation3 [shape = 's32[1]{0}', space=sflag, size = 0x4, scoped, tag = 'scoped memory for tpu_custom_call.1']
    %12 = vsyncpa [#allocation3], 0
    // Predicated region
    $region2: #{tpu_custom_call.1} parent=1 // pred_check
      _
    $region3: #{tpu_custom_call.1} parent=1 // pred_check_branch
      %14 = sbr.rel (0) target = $region5
    $region4: #{tpu_custom_call.1} parent=1 // pred_region
      _
    $region5: #{tpu_custom_call.1} parent=1 // pred_fallthru
      _
    // Predicated region
    $region6: #{tpu_custom_call.1} parent=1 // pred_check
      _
    $region7: #{tpu_custom_call.1} parent=1 // pred_check_branch
      %16 = sbr.rel (0) target = $region9
    $region8: #{tpu_custom_call.1} parent=1 // pred_region
      _
    $region9: #{tpu_custom_call.1} parent=1 // pred_fallthru
      _
    // Predicated region
    $region10: #{tpu_custom_call.1} parent=1 // pred_check
      _
    $region11: #{tpu_custom_call.1} parent=1 // pred_check_branch
      %18 = sbr.rel (0) target = $region13
    $region12: #{tpu_custom_call.1} parent=1 // pred_region
      _
    $region13: #{tpu_custom_call.1} parent=1 // pred_fallthru
      _
    // Predicated region
    $region14: #{tpu_custom_call.1} parent=1 // pred_check
      _
    $region15: #{tpu_custom_call.1} parent=1 // pred_check_branch
      %20 = sbr.rel (0) target = $region17
    $region16: #{tpu_custom_call.1} parent=1 // pred_region
      _
    $region17: #{tpu_custom_call.1} parent=1 // pred_fallthru
      _
    // Predicated region
    $region18: #{tpu_custom_call.1} parent=1 // pred_check
      _
    $region19: #{tpu_custom_call.1} parent=1 // pred_check_branch
      %22 = sbr.rel (0) target = $region21
    $region20: #{tpu_custom_call.1} parent=1 // pred_region
      _
    $region21: #{tpu_custom_call.1} parent=1 // pred_fallthru
      _
    // Predicated region
    $region22: #{tpu_custom_call.1} parent=1 // pred_check
      _
    $region23: #{tpu_custom_call.1} parent=1 // pred_check_branch
      %24 = sbr.rel (0) target = $region25
    $region24: #{tpu_custom_call.1} parent=1 // pred_region
      _
    $region25: #{tpu_custom_call.1} parent=1 // pred_fallthru
      _
    // Predicated region
    $region26: #{tpu_custom_call.1} parent=1 // pred_check
      _
    $region27: #{tpu_custom_call.1} parent=1 // pred_check_branch
      %26 = sbr.rel (0) target = $region29
    $region28: #{tpu_custom_call.1} parent=1 // pred_region
      _
    $region29: #{tpu_custom_call.1} parent=1 // pred_fallthru
      _
    %v27 = vld [vmem:[%s0] sm:$0xff]
    %v28 = vld [vmem:[%s0 + $0x8] sm:$0xff]
    %v29 = vld [vmem:[%s1] sm:$0x1]
    %v30 = vld [vmem:[%s2] sm:$0x1]
    %vm31 = vcmask 261120
    %v32 = vsel %vm31, %v27, 0.0
    %33 = vadd.xlane.f32.xlu0 %v32
    %v34 = vpop.xlane.xlu0 %33
    %v35 = vsel %vm31, %v28, 0.0
    %36 = vadd.xlane.f32.xlu0 %v35
    %v37 = vpop.xlane.xlu0 %36
    %v38 = vrcp.pop 32.0
    %v39 = vmul.f32 %v34, %v38
    %v40 = vmul.f32 %v37, %v38
    %v41 = vsub.f32 %v27, %v39
    %v42 = vsub.f32 %v28, %v40
    %v43 = vmul.f32 %v41, %v41
    %v44 = vmul.f32 %v42, %v42
    %v45 = vsel %vm31, %v43, 0.0
    %46 = vadd.xlane.f32.xlu0 %v45
    %v47 = vpop.xlane.xlu0 %46
    %v48 = vsel %vm31, %v44, 0.0
    %49 = vadd.xlane.f32.xlu0 %v48
    %v50 = vpop.xlane.xlu0 %49
    %v51 = vmul.f32 %v47, %v38
    %v52 = vmul.f32 %v50, %v38
    %v53 = vadd.f32 %v51, 1e-05
    %v54 = vadd.f32 %v52, 1e-05
    %v55 = vrsqrt.pop %v53
    %v56 = vrsqrt.pop %v54
    %v57 = vmul.f32 %v41, %v55
    %v58 = vmul.f32 %v42, %v56
    %v60 = vlaneseq
    %v61 = vshrl.u32 %v60, 7
    %v62 = vsub.s32 0, %v61
    %v63 = vrot.slane %v29, %v62
    %v65 = vmul.f32 %v57, %v63
    %v66 = vmul.f32 %v58, %v63
    %v68 = vlaneseq
    %v69 = vshrl.u32 %v68, 7
    %v70 = vsub.s32 0, %v69
    %v71 = vrot.slane %v30, %v70
    %v73 = vadd.f32 %v65, %v71
    %v74 = vadd.f32 %v66, %v71
    %v75 = vld [vmem:[%s3] sm:$0xff]
    %v76 = vld [vmem:[%s3 + $0x8] sm:$0xff]
    %v77 = vld [vmem:[%s3 + $0x10] sm:$0xff]
    %v78 = vld [vmem:[%s3 + $0x18] sm:$0xff]
    %v79 = vld [vmem:[%s4] sm:$0x1]
    %v81 = vlaneseq
    %v82 = vshrl.u32 %v81, 7
    %v83 = vsub.s32 0, %v82
    %v84 = vrot.slane %v79, %v83
    %v87 = vsel %vm31, %v73, 0
    %v90 = vsel %vm31, %v74, 0
    %92 = vmatprep.subr.mxu0 0.0
    %93 = vmatpush1.msra.mxu0 %v75
    %94 = vmatprep.subr.mxu0 0.0
    %95 = vmatpush1.msra.mxu0 %v76
    %96 = vmatprep.subr.mxu0 0.0
    %97 = vmatpush1.msra.mxu0 %v77
    %98 = vmatprep.subr.mxu0 0.0
    %99 = vmatpush1.msra.mxu0 %v78
    %100 = vmatprep.subr.mxu0 0.0
    %101 = vmatpush1.msra.mxu0 0.0
    %102 = vmatprep.subr.mxu0 0.0
    %103 = vmatpush1.msra.mxu0 0.0
    %104 = vmatprep.subr.mxu0 0.0
    %105 = vmatpush1.msra.mxu0 0.0
    %106 = vmatprep.subr.mxu0 0.0
    %107 = vmatpush1.msra.mxu0 0.0
    %108 = vmatprep.subr.mxu0 0.0
    %109 = vmatpush1.msra.mxu0 0.0
    %110 = vmatprep.subr.mxu0 0.0
    %111 = vmatpush1.msra.mxu0 0.0
    %112 = vmatprep.subr.mxu0 0.0
    %113 = vmatpush1.msra.mxu0 0.0
    %114 = vmatprep.subr.mxu0 0.0
    %115 = vmatpush1.msra.mxu0 0.0
    %116 = vmatprep.subr.mxu0 0.0
    %117 = vmatpush1.msra.mxu0 0.0
    %118 = vmatprep.subr.mxu0 0.0
    %119 = vmatpush1.msra.mxu0 0.0
    %120 = vmatprep.subr.mxu0 0.0
    %121 = vmatpush1.msra.mxu0 0.0
    %122 = vmatprep.subr.mxu0 0.0
    %123 = vmatpush1.msra.mxu0 0.0
    %124 = vmatprep.subr.mxu0 0.0
    %125 = vmatpush1.msra.mxu0 0.0
    %126 = vmatprep.subr.mxu0 0.0
    %127 = vmatpush1.msra.mxu0 0.0
    %128 = vmatprep.subr.mxu0 0.0
    %129 = vmatpush1.msra.mxu0 0.0
    %130 = vmatprep.subr.mxu0 0.0
    %131 = vmatpush1.msra.mxu0 0.0
    %132 = vmatprep.subr.mxu0 0.0
    %133 = vmatpush1.msra.mxu0 0.0
    %134 = vmatprep.subr.mxu0 0.0
    %135 = vmatpush1.msra.mxu0 0.0
    %136 = vmatprep.subr.mxu0 0.0
    %137 = vmatpush1.msra.mxu0 0.0
    %138 = vmatprep.subr.mxu0 0.0
    %139 = vmatpush1.msra.mxu0 0.0
    %140 = vmatprep.subr.mxu0 0.0
    %141 = vmatpush1.msra.mxu0 0.0
    %142 = vmatprep.subr.mxu0 0.0
    %143 = vmatpush1.msra.mxu0 0.0
    %144 = vmatprep.subr.mxu0 0.0
    %145 = vmatpush1.msra.mxu0 0.0
    %146 = vmatprep.subr.mxu0 0.0
    %147 = vmatpush1.msra.mxu0 0.0
    %148 = vmatprep.subr.mxu0 0.0
    %149 = vmatpush1.msra.mxu0 0.0
    %150 = vmatprep.subr.mxu0 0.0
    %151 = vmatpush1.msra.mxu0 0.0
    %152 = vmatprep.subr.mxu0 0.0
    %153 = vmatpush1.msra.mxu0 0.0
    %154 = vmatprep.subr.mxu0 0.0
    %155 = vmatpush1.msra.mxu0 0.0
    %156 = vmatprep.mubr.f32.mxu0 0.0
    %157 = vmatmul.mubr.f32.gmra.mrb[0].mxu0 %v87
    %v158 = vpop.f32.mrb[0].mxu0
    %v159 = vadd.f32 %v84, %v158
    %v160 = vpop.f32.mrb[0].mxu0
    %161 = vmatprep.mubr.f32.mxu0 0.0
    %162 = vmatmul.mubr.f32.gmra.mrb[0].mxu0 %v90
    %v163 = vpop.f32.mrb[0].mxu0
    %v164 = vadd.f32 %v84, %v163
    %v165 = vpop.f32.mrb[0].mxu0
    %166 = vdwg.mxu0
    %v167 = vmul.f32 %v159, 0.5
    %v168 = vmul.f32 %v164, 0.5
    %v169 = vmul.f32 %v159, 0.70710677
    %v170 = vmul.f32 %v164, 0.70710677
    %v171 = verf.f32.pop %v169
    %v172 = verf.f32.pop %v170
    %v173 = vadd.f32 %v171, 1.0
    %v174 = vadd.f32 %v172, 1.0
    %v175 = vmul.f32 %v167, %v173
    %v176 = vmul.f32 %v168, %v174
    %v177 = vld [vmem:[%s5] sm:$0xff]
    %v178 = vld [vmem:[%s5 + $0x8] sm:$0xff]
    %v179 = vld [vmem:[%s5 + $0x10] sm:$0xff]
    %v180 = vld [vmem:[%s5 + $0x18] sm:$0xff]
    %v181 = vld [vmem:[%s5 + $0x20] sm:$0xff]
    %v182 = vld [vmem:[%s5 + $0x28] sm:$0xff]
    %v183 = vld [vmem:[%s5 + $0x30] sm:$0xff]
    %v184 = vld [vmem:[%s5 + $0x38] sm:$0xff]
    %v185 = vld [vmem:[%s6] sm:$0x1]
    %v187 = vlaneseq
    %v188 = vshrl.u32 %v187, 7
    %v189 = vsub.s32 0, %v188
    %v190 = vrot.slane %v185, %v189
    %vm192 = vcmask 523264
    %v194 = vsel %vm192, %v175, 0
    %v197 = vsel %vm192, %v176, 0
    %199 = vmatprep.subr.mxu0 0.0
    %200 = vmatpush1.msra.mxu0 %v177
    %201 = vmatprep.subr.mxu0 0.0
    %202 = vmatpush1.msra.mxu0 %v178
    %203 = vmatprep.subr.mxu0 0.0
    %204 = vmatpush1.msra.mxu0 %v179
    %205 = vmatprep.subr.mxu0 0.0
    %206 = vmatpush1.msra.mxu0 %v180
    %207 = vmatprep.subr.mxu0 0.0
    %208 = vmatpush1.msra.mxu0 %v181
    %209 = vmatprep.subr.mxu0 0.0
    %210 = vmatpush1.msra.mxu0 %v182
    %211 = vmatprep.subr.mxu0 0.0
    %212 = vmatpush1.msra.mxu0 %v183
    %213 = vmatprep.subr.mxu0 0.0
    %214 = vmatpush1.msra.mxu0 %v184
    %215 = vmatprep.subr.mxu0 0.0
    %216 = vmatpush1.msra.mxu0 0.0
    %217 = vmatprep.subr.mxu0 0.0
    %218 = vmatpush1.msra.mxu0 0.0
    %219 = vmatprep.subr.mxu0 0.0
    %220 = vmatpush1.msra.mxu0 0.0
    %221 = vmatprep.subr.mxu0 0.0
    %222 = vmatpush1.msra.mxu0 0.0
    %223 = vmatprep.subr.mxu0 0.0
    %224 = vmatpush1.msra.mxu0 0.0
    %225 = vmatprep.subr.mxu0 0.0
    %226 = vmatpush1.msra.mxu0 0.0
    %227 = vmatprep.subr.mxu0 0.0
    %228 = vmatpush1.msra.mxu0 0.0
    %229 = vmatprep.subr.mxu0 0.0
    %230 = vmatpush1.msra.mxu0 0.0
    %231 = vmatprep.subr.mxu0 0.0
    %232 = vmatpush1.msra.mxu0 0.0
    %233 = vmatprep.subr.mxu0 0.0
    %234 = vmatpush1.msra.mxu0 0.0
    %235 = vmatprep.subr.mxu0 0.0
    %236 = vmatpush1.msra.mxu0 0.0
    %237 = vmatprep.subr.mxu0 0.0
    %238 = vmatpush1.msra.mxu0 0.0
    %239 = vmatprep.subr.mxu0 0.0
    %240 = vmatpush1.msra.mxu0 0.0
    %241 = vmatprep.subr.mxu0 0.0
    %242 = vmatpush1.msra.mxu0 0.0
    %243 = vmatprep.subr.mxu0 0.0
    %244 = vmatpush1.msra.mxu0 0.0
    %245 = vmatprep.subr.mxu0 0.0
    %246 = vmatpush1.msra.mxu0 0.0
    %247 = vmatprep.subr.mxu0 0.0
    %248 = vmatpush1.msra.mxu0 0.0
    %249 = vmatprep.subr.mxu0 0.0
    %250 = vmatpush1.msra.mxu0 0.0
    %251 = vmatprep.subr.mxu0 0.0
    %252 = vmatpush1.msra.mxu0 0.0
    %253 = vmatprep.subr.mxu0 0.0
    %254 = vmatpush1.msra.mxu0 0.0
    %255 = vmatprep.subr.mxu0 0.0
    %256 = vmatpush1.msra.mxu0 0.0
    %257 = vmatprep.subr.mxu0 0.0
    %258 = vmatpush1.msra.mxu0 0.0
    %259 = vmatprep.subr.mxu0 0.0
    %260 = vmatpush1.msra.mxu0 0.0
    %261 = vmatprep.subr.mxu0 0.0
    %262 = vmatpush1.msra.mxu0 0.0
    %263 = vmatprep.mubr.f32.mxu0 0.0
    %264 = vmatmul.mubr.f32.gmra.mrb[0].mxu0 %v194
    %v265 = vpop.f32.mrb[0].mxu0
    %v266 = vadd.f32 %v190, %v265
    %v267 = vpop.f32.mrb[0].mxu0
    %268 = vmatprep.mubr.f32.mxu0 0.0
    %269 = vmatmul.mubr.f32.gmra.mrb[0].mxu0 %v197
    %v270 = vpop.f32.mrb[0].mxu0
    %v271 = vadd.f32 %v190, %v270
    %v272 = vpop.f32.mrb[0].mxu0
    %273 = vdwg.mxu0
    %274 = vst.msk [vmem:[#allocation2] sm:$0xff] %vm31, %v266
    %275 = vst.msk [vmem:[#allocation2 + $0x8] sm:$0xff] %vm31, %v271
    // Predicated region
    $region30: #{tpu_custom_call.1} parent=1 // pred_check
      _
    $region31: #{tpu_custom_call.1} parent=1 // pred_check_branch
      %277 = sbr.rel (0) target = $region33
    $region32: #{tpu_custom_call.1} parent=1 // pred_region
      %s279 = ssub.s32 256, 256
      %280 = vsyncadd [#allocation3], %s279
      %s281 = sshll.u32 [#allocation2], 4
      %s282 = int_to_ptr.vmem [resolvable:$true] %s281
      %287 = dma.vmem_to_hbm [thread:$0]  %s282, 256, %s7, [#allocation3], 128, 128, 8
    $region33: #{tpu_custom_call.1} parent=1 // pred_fallthru
      _
    // Predicated region
    $region34: #{tpu_custom_call.1} parent=1 // pred_check
      _
    $region35: #{tpu_custom_call.1} parent=1 // pred_check_branch
      %289 = sbr.rel (0) target = $region37
    $region36: #{tpu_custom_call.1} parent=1 // pred_region
      %290 = dma.done [#allocation3], 256
    $region37: #{tpu_custom_call.1} parent=1 // pred_fallthru
      _
    %291 = vsyncpa [#allocation3], 1

// kernel: tpu_custom_call.1
$region0: #{tpu_custom_call.1}
  #allocation0 [shape = 'u32[]', space=smem, size = 0x4, offset = 0x4, fixed_abs, tag = 'smem constant byte address 0x4 - core index']
  #allocation1 [shape = 'u32[144,128]{1,0:T(1,128)}', space=vmem, size = 0x12000, scoped, tag = 'internal scratch']
  %s0 = inlined_call_operand.vmem [shape: f32[16,32], index: 0, kind: input, shape index: {}]
  %s1 = inlined_call_operand.vmem [shape: f32[1,32], index: 1, kind: input, shape index: {}]
  %s2 = inlined_call_operand.vmem [shape: f32[1,32], index: 2, kind: input, shape index: {}]
  %s3 = inlined_call_operand.vmem [shape: f32[32,64], index: 3, kind: input, shape index: {}]
  %s4 = inlined_call_operand.vmem [shape: f32[1,64], index: 4, kind: input, shape index: {}]
  %s5 = inlined_call_operand.vmem [shape: f32[64,32], index: 5, kind: input, shape index: {}]
  %s6 = inlined_call_operand.vmem [shape: f32[1,32], index: 6, kind: input, shape index: {}]
  %s7 = inlined_call_operand.hbm [shape: f32[16,32], index: 7, kind: output, shape index: {}]
  %s8 = sld [smem:[#allocation0]]
  $region38: #{tpu_custom_call.1} parent=0
    _
  %s10 = ssub.s32 1, %s8
  %s11 = scalar_select 0, %s10, %s8
  $region1: #{tpu_custom_call.1} parent=0
    #allocation2 [shape = 'u8[8192]{0}', space=vmem, size = 0x2000, scoped, tag = 'output window, operand 0, single buffered']
    #allocation3 [shape = 's32[1]{0}', space=sflag, size = 0x4, scoped, tag = 'scoped memory for tpu_custom_call.1']
    %12 = vsyncpa [#allocation3], 0
    // Predicated region
    $region2: #{tpu_custom_call.1} parent=1 // pred_check
      _
    $region3: #{tpu_custom_call.1} parent=1 // pred_check_branch
      %14 = sbr.rel (0) target = $region5
    $region4: #{tpu_custom_call.1} parent=1 // pred_region
      _
    $region5: #{tpu_custom_call.1} parent=1 // pred_fallthru
      _
    // Predicated region
    $region6: #{tpu_custom_call.1} parent=1 // pred_check
      _
    $region7: #{tpu_custom_call.1} parent=1 // pred_check_branch
      %16 = sbr.rel (0) target = $region9
    $region8: #{tpu_custom_call.1} parent=1 // pred_region
      _
    $region9: #{tpu_custom_call.1} parent=1 // pred_fallthru
      _
    // Predicated region
    $region10: #{tpu_custom_call.1} parent=1 // pred_check
      _
    $region11: #{tpu_custom_call.1} parent=1 // pred_check_branch
      %18 = sbr.rel (0) target = $region13
    $region12: #{tpu_custom_call.1} parent=1 // pred_region
      _
    $region13: #{tpu_custom_call.1} parent=1 // pred_fallthru
      _
    // Predicated region
    $region14: #{tpu_custom_call.1} parent=1 // pred_check
      _
    $region15: #{tpu_custom_call.1} parent=1 // pred_check_branch
      %20 = sbr.rel (0) target = $region17
    $region16: #{tpu_custom_call.1} parent=1 // pred_region
      _
    $region17: #{tpu_custom_call.1} parent=1 // pred_fallthru
      _
    // Predicated region
    $region18: #{tpu_custom_call.1} parent=1 // pred_check
      _
    $region19: #{tpu_custom_call.1} parent=1 // pred_check_branch
      %22 = sbr.rel (0) target = $region21
    $region20: #{tpu_custom_call.1} parent=1 // pred_region
      _
    $region21: #{tpu_custom_call.1} parent=1 // pred_fallthru
      _
    // Predicated region
    $region22: #{tpu_custom_call.1} parent=1 // pred_check
      _
    $region23: #{tpu_custom_call.1} parent=1 // pred_check_branch
      %24 = sbr.rel (0) target = $region25
    $region24: #{tpu_custom_call.1} parent=1 // pred_region
      _
    $region25: #{tpu_custom_call.1} parent=1 // pred_fallthru
      _
    // Predicated region
    $region26: #{tpu_custom_call.1} parent=1 // pred_check
      _
    $region27: #{tpu_custom_call.1} parent=1 // pred_check_branch
      %26 = sbr.rel (0) target = $region29
    $region28: #{tpu_custom_call.1} parent=1 // pred_region
      _
    $region29: #{tpu_custom_call.1} parent=1 // pred_fallthru
      _
    %v27 = vld [vmem:[%s0] sm:$0xff]
    %v28 = vld [vmem:[%s0 + $0x8] sm:$0xff]
    %v29 = vld [vmem:[%s1] sm:$0x1]
    %v30 = vld [vmem:[%s2] sm:$0x1]
    %vm31 = vcmask 261120
    %v32 = vsel %vm31, %v27, 0.0
    %33 = vadd.xlane.f32.xlu0 %v32
    %v34 = vpop.xlane.xlu0 %33
    %v35 = vsel %vm31, %v28, 0.0
    %36 = vadd.xlane.f32.xlu0 %v35
    %v37 = vpop.xlane.xlu0 %36
    %v38 = vrcp.pop 32.0
    %v39 = vmul.f32 %v34, %v38
    %v40 = vmul.f32 %v37, %v38
    %v41 = vsub.f32 %v27, %v39
    %v42 = vsub.f32 %v28, %v40
    %v43 = vmul.f32 %v41, %v41
    %v44 = vmul.f32 %v42, %v42
    %v45 = vsel %vm31, %v43, 0.0
    %46 = vadd.xlane.f32.xlu0 %v45
    %v47 = vpop.xlane.xlu0 %46
    %v48 = vsel %vm31, %v44, 0.0
    %49 = vadd.xlane.f32.xlu0 %v48
    %v50 = vpop.xlane.xlu0 %49
    %v51 = vmul.f32 %v47, %v38
    %v52 = vmul.f32 %v50, %v38
    %v53 = vadd.f32 %v51, 1e-05
    %v54 = vadd.f32 %v52, 1e-05
    %v55 = vrsqrt.pop %v53
    %v56 = vrsqrt.pop %v54
    %v57 = vmul.f32 %v41, %v55
    %v58 = vmul.f32 %v42, %v56
    %v60 = vlaneseq
    %v61 = vshrl.u32 %v60, 7
    %v62 = vsub.s32 0, %v61
    %v63 = vrot.slane %v29, %v62
    %v65 = vmul.f32 %v57, %v63
    %v66 = vmul.f32 %v58, %v63
    %v68 = vlaneseq
    %v69 = vshrl.u32 %v68, 7
    %v70 = vsub.s32 0, %v69
    %v71 = vrot.slane %v30, %v70
    %v73 = vadd.f32 %v65, %v71
    %v74 = vadd.f32 %v66, %v71
    %v75 = vld [vmem:[%s3] sm:$0xff]
    %v76 = vld [vmem:[%s3 + $0x8] sm:$0xff]
    %v77 = vld [vmem:[%s3 + $0x10] sm:$0xff]
    %v78 = vld [vmem:[%s3 + $0x18] sm:$0xff]
    %v79 = vld [vmem:[%s4] sm:$0x1]
    %v81 = vlaneseq
    %v82 = vshrl.u32 %v81, 7
    %v83 = vsub.s32 0, %v82
    %v84 = vrot.slane %v79, %v83
    %v87 = vsel %vm31, %v73, 0
    %v90 = vsel %vm31, %v74, 0
    %92 = vmatprep.subr.mxu0 0.0
    %93 = vmatpush1.msra.mxu0 %v75
    %94 = vmatprep.subr.mxu0 0.0
    %95 = vmatpush1.msra.mxu0 %v76
    %96 = vmatprep.subr.mxu0 0.0
    %97 = vmatpush1.msra.mxu0 %v77
    %98 = vmatprep.subr.mxu0 0.0
    %99 = vmatpush1.msra.mxu0 %v78
    %100 = vmatprep.subr.mxu0 0.0
    %101 = vmatpush1.msra.mxu0 0.0
    %102 = vmatprep.subr.mxu0 0.0
    %103 = vmatpush1.msra.mxu0 0.0
    %104 = vmatprep.subr.mxu0 0.0
    %105 = vmatpush1.msra.mxu0 0.0
    %106 = vmatprep.subr.mxu0 0.0
    %107 = vmatpush1.msra.mxu0 0.0
    %108 = vmatprep.subr.mxu0 0.0
    %109 = vmatpush1.msra.mxu0 0.0
    %110 = vmatprep.subr.mxu0 0.0
    %111 = vmatpush1.msra.mxu0 0.0
    %112 = vmatprep.subr.mxu0 0.0
    %113 = vmatpush1.msra.mxu0 0.0
    %114 = vmatprep.subr.mxu0 0.0
    %115 = vmatpush1.msra.mxu0 0.0
    %116 = vmatprep.subr.mxu0 0.0
    %117 = vmatpush1.msra.mxu0 0.0
    %118 = vmatprep.subr.mxu0 0.0
    %119 = vmatpush1.msra.mxu0 0.0
    %120 = vmatprep.subr.mxu0 0.0
    %121 = vmatpush1.msra.mxu0 0.0
    %122 = vmatprep.subr.mxu0 0.0
    %123 = vmatpush1.msra.mxu0 0.0
    %124 = vmatprep.subr.mxu0 0.0
    %125 = vmatpush1.msra.mxu0 0.0
    %126 = vmatprep.subr.mxu0 0.0
    %127 = vmatpush1.msra.mxu0 0.0
    %128 = vmatprep.subr.mxu0 0.0
    %129 = vmatpush1.msra.mxu0 0.0
    %130 = vmatprep.subr.mxu0 0.0
    %131 = vmatpush1.msra.mxu0 0.0
    %132 = vmatprep.subr.mxu0 0.0
    %133 = vmatpush1.msra.mxu0 0.0
    %134 = vmatprep.subr.mxu0 0.0
    %135 = vmatpush1.msra.mxu0 0.0
    %136 = vmatprep.subr.mxu0 0.0
    %137 = vmatpush1.msra.mxu0 0.0
    %138 = vmatprep.subr.mxu0 0.0
    %139 = vmatpush1.msra.mxu0 0.0
    %140 = vmatprep.subr.mxu0 0.0
    %141 = vmatpush1.msra.mxu0 0.0
    %142 = vmatprep.subr.mxu0 0.0
    %143 = vmatpush1.msra.mxu0 0.0
    %144 = vmatprep.subr.mxu0 0.0
    %145 = vmatpush1.msra.mxu0 0.0
    %146 = vmatprep.subr.mxu0 0.0
    %147 = vmatpush1.msra.mxu0 0.0
    %148 = vmatprep.subr.mxu0 0.0
    %149 = vmatpush1.msra.mxu0 0.0
    %150 = vmatprep.subr.mxu0 0.0
    %151 = vmatpush1.msra.mxu0 0.0
    %152 = vmatprep.subr.mxu0 0.0
    %153 = vmatpush1.msra.mxu0 0.0
    %154 = vmatprep.subr.mxu0 0.0
    %155 = vmatpush1.msra.mxu0 0.0
    %156 = vmatprep.mubr.f32.mxu0 0.0
    %157 = vmatmul.mubr.f32.gmra.mrb[0].mxu0 %v87
    %v158 = vpop.f32.mrb[0].mxu0
    %v159 = vadd.f32 %v84, %v158
    %v160 = vpop.f32.mrb[0].mxu0
    %161 = vmatprep.mubr.f32.mxu0 0.0
    %162 = vmatmul.mubr.f32.gmra.mrb[0].mxu0 %v90
    %v163 = vpop.f32.mrb[0].mxu0
    %v164 = vadd.f32 %v84, %v163
    %v165 = vpop.f32.mrb[0].mxu0
    %166 = vdwg.mxu0
    %v167 = vmul.f32 %v159, 0.5
    %v168 = vmul.f32 %v164, 0.5
    %v169 = vmul.f32 %v159, 0.70710677
    %v170 = vmul.f32 %v164, 0.70710677
    %v171 = verf.f32.pop %v169
    %v172 = verf.f32.pop %v170
    %v173 = vadd.f32 %v171, 1.0
    %v174 = vadd.f32 %v172, 1.0
    %v175 = vmul.f32 %v167, %v173
    %v176 = vmul.f32 %v168, %v174
    %v177 = vld [vmem:[%s5] sm:$0xff]
    %v178 = vld [vmem:[%s5 + $0x8] sm:$0xff]
    %v179 = vld [vmem:[%s5 + $0x10] sm:$0xff]
    %v180 = vld [vmem:[%s5 + $0x18] sm:$0xff]
    %v181 = vld [vmem:[%s5 + $0x20] sm:$0xff]
    %v182 = vld [vmem:[%s5 + $0x28] sm:$0xff]
    %v183 = vld [vmem:[%s5 + $0x30] sm:$0xff]
    %v184 = vld [vmem:[%s5 + $0x38] sm:$0xff]
    %v185 = vld [vmem:[%s6] sm:$0x1]
    %v187 = vlaneseq
    %v188 = vshrl.u32 %v187, 7
    %v189 = vsub.s32 0, %v188
    %v190 = vrot.slane %v185, %v189
    %vm192 = vcmask 523264
    %v194 = vsel %vm192, %v175, 0
    %v197 = vsel %vm192, %v176, 0
    %199 = vmatprep.subr.mxu0 0.0
    %200 = vmatpush1.msra.mxu0 %v177
    %201 = vmatprep.subr.mxu0 0.0
    %202 = vmatpush1.msra.mxu0 %v178
    %203 = vmatprep.subr.mxu0 0.0
    %204 = vmatpush1.msra.mxu0 %v179
    %205 = vmatprep.subr.mxu0 0.0
    %206 = vmatpush1.msra.mxu0 %v180
    %207 = vmatprep.subr.mxu0 0.0
    %208 = vmatpush1.msra.mxu0 %v181
    %209 = vmatprep.subr.mxu0 0.0
    %210 = vmatpush1.msra.mxu0 %v182
    %211 = vmatprep.subr.mxu0 0.0
    %212 = vmatpush1.msra.mxu0 %v183
    %213 = vmatprep.subr.mxu0 0.0
    %214 = vmatpush1.msra.mxu0 %v184
    %215 = vmatprep.subr.mxu0 0.0
    %216 = vmatpush1.msra.mxu0 0.0
    %217 = vmatprep.subr.mxu0 0.0
    %218 = vmatpush1.msra.mxu0 0.0
    %219 = vmatprep.subr.mxu0 0.0
    %220 = vmatpush1.msra.mxu0 0.0
    %221 = vmatprep.subr.mxu0 0.0
    %222 = vmatpush1.msra.mxu0 0.0
    %223 = vmatprep.subr.mxu0 0.0
    %224 = vmatpush1.msra.mxu0 0.0
    %225 = vmatprep.subr.mxu0 0.0
    %226 = vmatpush1.msra.mxu0 0.0
    %227 = vmatprep.subr.mxu0 0.0
    %228 = vmatpush1.msra.mxu0 0.0
    %229 = vmatprep.subr.mxu0 0.0
    %230 = vmatpush1.msra.mxu0 0.0
    %231 = vmatprep.subr.mxu0 0.0
    %232 = vmatpush1.msra.mxu0 0.0
    %233 = vmatprep.subr.mxu0 0.0
    %234 = vmatpush1.msra.mxu0 0.0
    %235 = vmatprep.subr.mxu0 0.0
    %236 = vmatpush1.msra.mxu0 0.0
    %237 = vmatprep.subr.mxu0 0.0
    %238 = vmatpush1.msra.mxu0 0.0
    %239 = vmatprep.subr.mxu0 0.0
    %240 = vmatpush1.msra.mxu0 0.0
    %241 = vmatprep.subr.mxu0 0.0
    %242 = vmatpush1.msra.mxu0 0.0
    %243 = vmatprep.subr.mxu0 0.0
    %244 = vmatpush1.msra.mxu0 0.0
    %245 = vmatprep.subr.mxu0 0.0
    %246 = vmatpush1.msra.mxu0 0.0
    %247 = vmatprep.subr.mxu0 0.0
    %248 = vmatpush1.msra.mxu0 0.0
    %249 = vmatprep.subr.mxu0 0.0
    %250 = vmatpush1.msra.mxu0 0.0
    %251 = vmatprep.subr.mxu0 0.0
    %252 = vmatpush1.msra.mxu0 0.0
    %253 = vmatprep.subr.mxu0 0.0
    %254 = vmatpush1.msra.mxu0 0.0
    %255 = vmatprep.subr.mxu0 0.0
    %256 = vmatpush1.msra.mxu0 0.0
    %257 = vmatprep.subr.mxu0 0.0
    %258 = vmatpush1.msra.mxu0 0.0
    %259 = vmatprep.subr.mxu0 0.0
    %260 = vmatpush1.msra.mxu0 0.0
    %261 = vmatprep.subr.mxu0 0.0
    %262 = vmatpush1.msra.mxu0 0.0
    %263 = vmatprep.mubr.f32.mxu0 0.0
    %264 = vmatmul.mubr.f32.gmra.mrb[0].mxu0 %v194
    %v265 = vpop.f32.mrb[0].mxu0
    %v266 = vadd.f32 %v190, %v265
    %v267 = vpop.f32.mrb[0].mxu0
    %268 = vmatprep.mubr.f32.mxu0 0.0
    %269 = vmatmul.mubr.f32.gmra.mrb[0].mxu0 %v197
    %v270 = vpop.f32.mrb[0].mxu0
    %v271 = vadd.f32 %v190, %v270
    %v272 = vpop.f32.mrb[0].mxu0
    %273 = vdwg.mxu0
    %274 = vst.msk [vmem:[#allocation2] sm:$0xff] %vm31, %v266
    %275 = vst.msk [vmem:[#allocation2 + $0x8] sm:$0xff] %vm31, %v271
    // Predicated region
    $region30: #{tpu_custom_call.1} parent=1 // pred_check
      _
    $region31: #{tpu_custom_call.1} parent=1 // pred_check_branch
      %277 = sbr.rel (0) target = $region33
    $region32: #{tpu_custom_call.1} parent=1 // pred_region
      %s279 = ssub.s32 256, 256
      %280 = vsyncadd [#allocation3], %s279
      %s281 = sshll.u32 [#allocation2], 4
      %s282 = int_to_ptr.vmem [resolvable:$true] %s281
      %287 = dma.vmem_to_hbm [thread:$0]  %s282, 256, %s7, [#allocation3], 128, 128, 8
    $region33: #{tpu_custom_call.1} parent=1 // pred_fallthru
      _
    // Predicated region
    $region34: #{tpu_custom_call.1} parent=1 // pred_check
      _
    $region35: #{tpu_custom_call.1} parent=1 // pred_check_branch
      %289 = sbr.rel (0) target = $region37
    $region36: #{tpu_custom_call.1} parent=1 // pred_region
      %290 = dma.done [#allocation3], 256
    $region37: #{tpu_custom_call.1} parent=1 // pred_fallthru
      _
    %291 = vsyncpa [#allocation3], 1

</llo_original>
